<compile_context>
chip_gen: v6e
topology: v6e:2x2x1
jax: 0.10.0
libtpu: 0.0.40
codegen_flags: <defaults>
</compile_context>

<pallas_src>
import functools

import jax
import jax.numpy as jnp
from jax.experimental import pallas as pl
from jax.experimental.pallas import tpu as pltpu

W_BIT = 4  # any 1 < w_bit < 32; quantizer uses k = w_bit - 1


def _weight_quant_kernel(x_ref, o_ref, *, n):
    # x_ref / o_ref: (TO, F) tile in the weight's native dtype; F is the full I*KH*KW
    # extent so the per-output-channel reduction is a single lane-axis max.
    x = x_ref[...].astype(jnp.float32)          # upcast on-chip (v5e has no bf16 VALU)
    scale = jnp.max(jnp.abs(x), axis=1, keepdims=True)       # (TO, 1) per-row max|x|
    inv_scale = pl.reciprocal(scale, approx=False)            # one EUP op per row
    # Fold constants; n is a power of two, so inv_scale*n and scale/n are exact scalings.
    #   q   = clamp(round(x * (n / scale)), -n, n - 1)
    #   out = q * (scale / n)
    q = jnp.clip(jnp.round(x * (inv_scale * n)), -n, n - 1.0)
    o_ref[...] = (q * (scale * (1.0 / n))).astype(o_ref.dtype)


def weight_quantize(x, w_bit=W_BIT):
    """x: (O, I, KH, KW) float -> DoReFa-quantized weights, same shape/dtype."""
    assert 1 < w_bit < 32
    O, I, KH, KW = x.shape
    F = I * KH * KW
    x2d = x.reshape(O, F)                       # free reshape; no cast, no pad

    itemsize = jnp.dtype(x.dtype).itemsize
    row_align = max(8, 32 // itemsize)          # sublane packing: f32->8, bf16->16, i8->32

    # Row-tile size: ~4 MiB input blocks (amortize per-grid-step overhead), aligned to the
    # sublane packing, never exceeding the row extent.  Last block may be ragged; Pallas
    # masks its reads/writes and the garbage rows are per-row independent.
    target_bytes = 4 << 20
    row_bytes = max(F * itemsize, 1)
    if O <= row_align:
        TO = O                                  # full first dim (always legal)
    else:
        TO = max(row_align, (target_bytes // row_bytes) // row_align * row_align)
        TO = min(TO, 4096)
        TO = min(TO, (O // row_align) * row_align)

    block_in = TO * F * itemsize
    block_f32 = TO * F * 4
    # in + out double-buffered (native dtype) + headroom for f32 body temporaries + slack;
    # explicit so the tiling holds on v5e (16 MiB default scoped) and v7x (64 MiB physical).
    vmem_limit = 4 * block_in + 3 * block_f32 + (4 << 20)
    vmem_limit = int(min(48 << 20, max(16 << 20, vmem_limit)))

    kernel = functools.partial(_weight_quant_kernel, n=float(2 ** (w_bit - 1)))

    out2d = pl.pallas_call(
        kernel,
        out_shape=jax.ShapeDtypeStruct((O, F), x.dtype),
        grid=(pl.cdiv(O, TO),),
        in_specs=[pl.BlockSpec((TO, F), lambda i: (i, 0))],
        out_specs=pl.BlockSpec((TO, F), lambda i: (i, 0)),
        compiler_params=pltpu.CompilerParams(
            dimension_semantics=("parallel",),   # rows independent -> both TCs on v7x
            vmem_limit_bytes=vmem_limit,
        ),
    )(x2d)

    return out2d.reshape(O, I, KH, KW)


def _reference(x, w_bit=W_BIT):
    # Pure-JAX mirror of the PyTorch forward.
    O = x.shape[0]
    scale = jnp.max(jnp.abs(x).reshape(O, -1), axis=1).reshape(O, 1, 1, 1)
    w = x / scale
    n = 2.0 ** (w_bit - 1)
    q = jnp.clip(jnp.round(w * n), -n, n - 1.0) / n
    return q * scale


if __name__ == "__main__":
    key = jax.random.PRNGKey(0)
    # Small conv-weight-like tensor: (out_ch=8, in_ch=4, kh=3, kw=3)
    x = jax.random.normal(key, (8, 4, 3, 3), dtype=jnp.float32)

    out = jax.block_until_ready(weight_quantize(x, W_BIT))
    ref = _reference(x, W_BIT)

    assert out.shape == x.shape and out.dtype == x.dtype
    assert jnp.allclose(out, ref, atol=1e-6, rtol=1e-6)

    print("KERNEL_OK")
</pallas_src>

<mosaic_0001>
module attributes {stable_mosaic.version = 11 : i64} {
  func.func @_weight_quant_kernel(%arg0: i32, %arg1: memref<8x36xf32, #tpu.memory_space<vmem>>, %arg2: memref<8x36xf32, #tpu.memory_space<vmem>>) attributes {dimension_semantics = [#tpu.dimension_semantics<parallel>], iteration_bounds = array<i64: 1>, scalar_prefetch = 0 : i64, scratch_operands = 0 : i64, tpu.core_type = #tpu.core_type<tc>, window_params = [{transform_indices = @transform_0, window_bounds = array<i64: 8, 36>}, {transform_indices = @transform_1, window_bounds = array<i64: 8, 36>}]} {
    %c0 = arith.constant 0 : index
    %c0_0 = arith.constant 0 : index
    %0 = vector.load %arg1[%c0, %c0_0] : memref<8x36xf32, #tpu.memory_space<vmem>>, vector<8x36xf32>
    %1 = math.absf %0 : vector<8x36xf32>
    %cst = arith.constant dense<0xFF800000> : vector<8xf32>
    %2 = vector.multi_reduction <maximumf>, %1, %cst [1] : vector<8x36xf32> to vector<8xf32>
    %3 = vector.shape_cast %2 : vector<8xf32> to vector<8x1xf32>
    %4 = tpu.reciprocal %3 : vector<8x1xf32> -> vector<8x1xf32>
    %cst_1 = arith.constant 8.000000e+00 : f32
    %5 = vector.broadcast %cst_1 : f32 to vector<8x1xf32>
    %6 = arith.mulf %4, %5 : vector<8x1xf32>
    %7 = vector.broadcast %6 : vector<8x1xf32> to vector<8x36xf32>
    %8 = arith.mulf %0, %7 : vector<8x36xf32>
    %9 = math.roundeven %8 : vector<8x36xf32>
    %cst_2 = arith.constant -8.000000e+00 : f32
    %cst_3 = arith.constant 7.000000e+00 : f32
    %10 = vector.broadcast %cst_2 : f32 to vector<8x36xf32>
    %11 = arith.maximumf %10, %9 : vector<8x36xf32>
    %12 = vector.broadcast %cst_3 : f32 to vector<8x36xf32>
    %13 = arith.minimumf %12, %11 : vector<8x36xf32>
    %cst_4 = arith.constant 1.250000e-01 : f32
    %14 = vector.broadcast %cst_4 : f32 to vector<8x1xf32>
    %15 = arith.mulf %3, %14 : vector<8x1xf32>
    %16 = vector.broadcast %15 : vector<8x1xf32> to vector<8x36xf32>
    %17 = arith.mulf %13, %16 : vector<8x36xf32>
    %c0_5 = arith.constant 0 : index
    %c0_6 = arith.constant 0 : index
    %18 = vector.load %arg2[%c0_5, %c0_6] : memref<8x36xf32, #tpu.memory_space<vmem>>, vector<8x36xf32>
    tpu.vector_store %arg2[%c0_5, %c0_6], %17 {strides = array<i32>} : memref<8x36xf32, #tpu.memory_space<vmem>>, vector<8x36xf32>,
    return
  }
  func.func @transform_0(%arg0: i32) -> (i32, i32) {
    %c0_i32 = arith.constant 0 : i32
    %c0_i32_0 = arith.constant 0 : i32
    return %arg0, %c0_i32 : i32, i32
  }
  func.func @transform_1(%arg0: i32) -> (i32, i32) {
    %c0_i32 = arith.constant 0 : i32
    %c0_i32_0 = arith.constant 0 : i32
    return %arg0, %c0_i32 : i32, i32
  }
}

</mosaic_0001>

<llo_original>
// kernel: tpu_custom_call.1
$region0: #{tpu_custom_call.1}
  #allocation0 [shape = 'u32[]', space=smem, size = 0x4, offset = 0x4, fixed_abs, tag = 'smem constant byte address 0x4 - core index']
  #allocation1 [shape = 'u32[144,128]{1,0:T(1,128)}', space=vmem, size = 0x12000, scoped, tag = 'internal scratch']
  %s0 = inlined_call_operand.hbm [shape: f32[8,36], index: 0, kind: input, shape index: {}]
  %s1 = inlined_call_operand.hbm [shape: f32[8,36], index: 1, kind: output, shape index: {}]
  %s2 = sld [smem:[#allocation0]]
  $region18: #{tpu_custom_call.1} parent=0
    _
  %s4 = ssub.s32 1, %s2
  %s5 = scalar_select 0, %s4, %s2
  $region1: #{tpu_custom_call.1} parent=0
    #allocation2 [shape = 'u8[4096]{0}', space=vmem, size = 0x1000, scoped, tag = 'input window, operand 0, single buffered']
    #allocation3 [shape = 's32[1]{0}', space=sflag, size = 0x4, scoped, tag = 'scoped memory for tpu_custom_call.1']
    #allocation4 [shape = 's32[1]{0}', space=sflag, size = 0x4, scoped, tag = 'scoped memory for tpu_custom_call.1']
    #allocation5 [shape = 'u8[4096]{0}', space=vmem, size = 0x1000, scoped, tag = 'output window, operand 0, single buffered']
    %6 = vsyncpa [#allocation3], 0
    %7 = vsyncpa [#allocation4], 0
    // Predicated region
    $region2: #{tpu_custom_call.1} parent=1 // pred_check
      _
    $region3: #{tpu_custom_call.1} parent=1 // pred_check_branch
      %9 = sbr.rel (0) target = $region5
    $region4: #{tpu_custom_call.1} parent=1 // pred_region
      %s11 = ssub.s32 128, 128
      %12 = vsyncadd [#allocation3], %s11
      %s14 = sshll.u32 [#allocation2], 4
      %s15 = int_to_ptr.vmem [resolvable:$true] %s14
      %17 = dma.hbm_to_vmem [thread:$0]  %s0, 128, %s15, [#allocation3]
    $region5: #{tpu_custom_call.1} parent=1 // pred_fallthru
      _
    // Predicated region
    $region6: #{tpu_custom_call.1} parent=1 // pred_check
      _
    $region7: #{tpu_custom_call.1} parent=1 // pred_check_branch
      %19 = sbr.rel (0) target = $region9
    $region8: #{tpu_custom_call.1} parent=1 // pred_region
      %20 = dma.done [#allocation3], 128
    $region9: #{tpu_custom_call.1} parent=1 // pred_fallthru
      _
    %v21 = vld [vmem:[#allocation2] sm:$0xff]
    %v22 = vand.u32 2147483647, %v21
    %vm23 = vcmask 293888
    %v24 = vsel %vm23, %v22, -inf
    %25 = vmax.xlane.f32.xlu0 %v24
    %v26 = vpop.xlane.xlu0 %25
    %v27 = vrcp.pop %v26
    %v28 = vmul.f32 %v27, 8.0
    %v29 = vmul.f32 %v21, %v28
    %v30 = vround.ne.pseudo %v29
    %v31 = vmax.f32 %v30, -8.0
    %v32 = vmin.f32 %v31, 7.0
    %v33 = vmul.f32 %v26, 0.125
    %v34 = vmul.f32 %v32, %v33
    %35 = vst.msk [vmem:[#allocation5] sm:$0xff] %vm23, %v34
    // Predicated region
    $region10: #{tpu_custom_call.1} parent=1 // pred_check
      _
    $region11: #{tpu_custom_call.1} parent=1 // pred_check_branch
      %37 = sbr.rel (0) target = $region13
    $region12: #{tpu_custom_call.1} parent=1 // pred_region
      %s39 = ssub.s32 128, 128
      %40 = vsyncadd [#allocation4], %s39
      %s42 = sshll.u32 [#allocation5], 4
      %s43 = int_to_ptr.vmem [resolvable:$true] %s42
      %45 = dma.vmem_to_hbm [thread:$0]  %s43, 128, %s1, [#allocation4]
    $region13: #{tpu_custom_call.1} parent=1 // pred_fallthru
      _
    // Predicated region
    $region14: #{tpu_custom_call.1} parent=1 // pred_check
      _
    $region15: #{tpu_custom_call.1} parent=1 // pred_check_branch
      %47 = sbr.rel (0) target = $region17
    $region16: #{tpu_custom_call.1} parent=1 // pred_region
      %48 = dma.done [#allocation4], 128
    $region17: #{tpu_custom_call.1} parent=1 // pred_fallthru
      _
    %49 = vsyncpa [#allocation3], 1
    %50 = vsyncpa [#allocation4], 1

</llo_original>
